<compile_context>
chip_gen: v6e
topology: v6e:2x2x1
jax: 0.10.0
libtpu: 0.0.40
codegen_flags: <defaults>
</compile_context>

<pallas_src>
import math

import jax
import jax.numpy as jnp
from jax import lax
from jax.experimental import pallas as pl
from jax.experimental.pallas import tpu as pltpu


def _gated_proto_kernel(x_ref, ctx_ref, w_ref, b_ref, proto_ref, psq_ref, out_ref):
    # Per grid step o (a block of TILE_O output features):
    #   x_ref     : (B, I)            full input (resident across steps)
    #   ctx_ref   : (B, C)            full context (resident across steps)
    #   w_ref     : (P, TILE_O, I)    weight slab, prototype-major (compute dtype)
    #   b_ref     : (P, TILE_O)       bias slab (f32)
    #   proto_ref : (P, TILE_O, C)    prototype slab (gate dtype)
    #   psq_ref   : (P, TILE_O)       ||prototype||^2 slab (f32)
    #   out_ref   : (B, TILE_O)       lane-dense output block (f32)
    P, tile_o, I = w_ref.shape
    C = proto_ref.shape[-1]

    x = x_ref[...]                                       # (B, I)
    ctx = ctx_ref[...]                                   # (B, C)
    # Leading-dim merge only (I / C stay in lanes) — layout-preserving reshape.
    w = w_ref[...].reshape(P * tile_o, I)
    proto = proto_ref[...].reshape(P * tile_o, C)
    bias = b_ref[...]                                    # (P, TILE_O) f32
    psq = psq_ref[...]                                   # (P, TILE_O) f32

    # Fused MXU matmul, N = P*TILE_O lane-dense, f32 accumulation.
    lin = lax.dot_general(x, w, (((1,), (1,)), ((), ())),
                          preferred_element_type=jnp.float32)   # (B, P*TILE_O)
    # Prototype distance scores on the MXU (||ctx||^2 constant over p, dropped):
    #   argmin_p ||proto - ctx||^2 == argmin_p (||proto||^2 - 2 * ctx . proto)
    dots = lax.dot_general(ctx, proto, (((1,), (1,)), ((), ())),
                           preferred_element_type=jnp.float32)  # (B, P*TILE_O)

    def lanes(a, p):  # contiguous (B, TILE_O) lane slice for prototype p
        return a[:, p * tile_o:(p + 1) * tile_o]

    # Running first-min selection over the P prototypes.  Strict '<' keeps the
    # earliest index on ties, matching torch.argmin.  No cross-lane reduce, no
    # (B, TILE_O, P) reshape — just P-1 compare/selects on (B, TILE_O) tiles.
    best_d = psq[0:1, :] - 2.0 * lanes(dots, 0)
    best_y = lanes(lin, 0) + bias[0:1, :]
    for p in range(1, P):
        d_p = psq[p:p + 1, :] - 2.0 * lanes(dots, p)
        y_p = lanes(lin, p) + bias[p:p + 1, :]
        take = d_p < best_d
        best_d = jnp.where(take, d_p, best_d)
        best_y = jnp.where(take, y_p, best_y)

    out_ref[...] = best_y.astype(out_ref.dtype)


def _vmem_limits():
    """(vmem_limit_bytes, tile_budget_bytes) derived per TPU generation."""
    cap = None
    try:
        cap = getattr(pltpu.get_tpu_info(), "vmem_capacity_bytes", None)
    except Exception:
        cap = None
    if not cap:
        cap = 64 << 20                       # conservative default (v7x per-TC VMEM)
    vmem_limit = int(min(cap * 3 // 4, 100 << 20))   # ~48 MiB v7x, ~96-100 MiB v5e/v6e
    tile_budget = vmem_limit * 3 // 4                # headroom for compiler internals
    return vmem_limit, tile_budget


def _pick_tile_o(B, O_pad, P, I, C, w_itemsize, proto_itemsize,
                 tile_budget_bytes, max_lanes=2048):
    """Largest legal TILE_O whose *total* double-buffered footprint fits the budget.

    Legal tiles: multiples of 128 dividing O_pad.  When O_pad >= 256 the full-O
    tile is excluded so the grid has >= 2 steps (lets v7x's 2 TCs split the O
    loop).  P*TILE_O is capped to bound vreg pressure from the (B, P*TILE_O)
    f32 lin/dots intermediates.
    """
    candidates = [d for d in range(128, O_pad + 1, 128) if O_pad % d == 0]
    if O_pad >= 256:
        multi = [d for d in candidates if d < O_pad]
        if multi:
            candidates = multi
    capped = [d for d in candidates if P * d <= max_lanes]
    if capped:
        candidates = capped

    def footprint(t):
        return (2 * t * P * I * w_itemsize          # weight slab (double-buffered)
                + 2 * t * P * C * proto_itemsize    # prototype slab
                + 2 * t * P * 4 * 2                 # bias + psq (f32)
                + 2 * B * t * 4                     # output block (f32)
                + 2 * B * I * w_itemsize            # x
                + 2 * B * C * proto_itemsize)       # context

    fitting = [d for d in candidates if footprint(d) <= tile_budget_bytes]
    return max(fitting) if fitting else min(candidates)


def prepare_params(weight, bias, prototypes, *,
                   compute_dtype=jnp.bfloat16, gate_dtype=jnp.float32):
    """One-time layout/dtype prep — do this at parameter-load time, not per call.

    compute_dtype: dtype of weight (and x) in the heavy matmul; bf16 default
                   (accumulation is always f32).
    gate_dtype:    dtype of prototypes/context in the distance matmul; keep f32
                   (default) for exact argmin behavior, bf16 to also halve that
                   HBM stream when C is large.  ||proto||^2 always stays f32.
    """
    O, P, I = weight.shape
    C = prototypes.shape[-1]
    O_pad = ((O + 127) // 128) * 128         # lane-dense outputs / slabs

    def pad_o(a):
        if O_pad == O:
            return a
        return jnp.pad(a, [(0, O_pad - O)] + [(0, 0)] * (a.ndim - 1))

    w_t = jnp.transpose(pad_o(weight), (1, 0, 2)).astype(compute_dtype)        # (P, O_pad, I)
    proto_f32 = jnp.transpose(pad_o(prototypes), (1, 0, 2)).astype(jnp.float32)
    psq_t = jnp.sum(proto_f32 * proto_f32, axis=-1)                            # (P, O_pad) f32
    proto_t = proto_f32.astype(gate_dtype)                                     # (P, O_pad, C)
    b_t = jnp.transpose(pad_o(bias), (1, 0)).astype(jnp.float32)               # (P, O_pad)
    return {"w": w_t, "b": b_t, "proto": proto_t, "psq": psq_t, "out_features": O}


def linear_gated_proto_prepared(x, context, params, *, tile_o=None):
    """Pallas LinearGatedProto.forward on pre-layouted params. Returns (B, O) f32."""
    w_t, b_t = params["w"], params["b"]
    proto_t, psq_t = params["proto"], params["psq"]
    O = params["out_features"]
    P, O_pad, I = w_t.shape
    C = proto_t.shape[-1]
    B = x.shape[0]
    f32 = jnp.float32

    x_c = x.astype(w_t.dtype)
    ctx = context.astype(proto_t.dtype)

    w_isz = jnp.dtype(w_t.dtype).itemsize
    p_isz = jnp.dtype(proto_t.dtype).itemsize
    vmem_limit, tile_budget = _vmem_limits()
    if tile_o is None:
        tile_o = _pick_tile_o(B, O_pad, P, I, C, w_isz, p_isz, tile_budget)
    assert O_pad % tile_o == 0 and tile_o % 128 == 0, \
        "tile_o must be a multiple of 128 dividing the padded out_features"
    grid = (O_pad // tile_o,)

    cost = pl.CostEstimate(
        flops=2 * B * P * O_pad * (I + C),
        transcendentals=0,
        bytes_accessed=(P * O_pad * (I * w_isz + C * p_isz + 8)
                        + B * (I * w_isz + C * p_isz) + B * O_pad * 4),
    )

    out = pl.pallas_call(
        _gated_proto_kernel,
        out_shape=jax.ShapeDtypeStruct((B, O_pad), f32),
        grid_spec=pltpu.PrefetchScalarGridSpec(
            num_scalar_prefetch=0,
            grid=grid,
            in_specs=[
                pl.BlockSpec((B, I), lambda o: (0, 0)),             # x (shared)
                pl.BlockSpec((B, C), lambda o: (0, 0)),             # context (shared)
                pl.BlockSpec((P, tile_o, I), lambda o: (0, o, 0)),  # weight slab
                pl.BlockSpec((P, tile_o), lambda o: (0, o)),        # bias slab
                pl.BlockSpec((P, tile_o, C), lambda o: (0, o, 0)),  # prototype slab
                pl.BlockSpec((P, tile_o), lambda o: (0, o)),        # ||proto||^2 slab
            ],
            out_specs=pl.BlockSpec((B, tile_o), lambda o: (0, o)),  # lane-dense out
        ),
        compiler_params=pltpu.CompilerParams(
            dimension_semantics=("parallel",),   # shards O steps across TCs (v7x)
            vmem_limit_bytes=vmem_limit,
        ),
        cost_estimate=cost,
    )(x_c, ctx, w_t, b_t, proto_t, psq_t)

    return out if O_pad == O else out[:, :O]


def linear_gated_proto(x, context, weight, bias, prototypes, *,
                       compute_dtype=jnp.bfloat16, gate_dtype=jnp.float32,
                       tile_o=None):
    """Convenience wrapper: per-call prep + kernel.  In production, call
    prepare_params() once at load time and reuse linear_gated_proto_prepared."""
    params = prepare_params(weight, bias, prototypes,
                            compute_dtype=compute_dtype, gate_dtype=gate_dtype)
    return linear_gated_proto_prepared(x, context, params, tile_o=tile_o)


def reference(x, context, weight, bias, prototypes):
    """Plain-JAX replica of the PyTorch forward, for verification."""
    aco = jnp.einsum('opi,bi->bop', weight, x) + bias[None]                   # (B,O,P)
    d = jnp.sqrt(jnp.sum(
        (prototypes[None] - context[:, None, None, :]) ** 2, axis=-1))        # (B,O,P)
    best = jnp.argmin(d, axis=-1)                                             # (B,O)
    gate = jax.nn.one_hot(best, weight.shape[1], dtype=aco.dtype)             # (B,O,P)
    return jnp.sum(aco * gate, axis=-1)                                       # (B,O)


def _make_inputs(key, B, I, O, C, P):
    k1, k2, k3, k4, k5 = jax.random.split(key, 5)
    bound = 1.0 / math.sqrt(I)
    weight = jax.random.uniform(k1, (O, P, I), jnp.float32, -bound, bound)
    bias = jax.random.uniform(k2, (O, P), jnp.float32, -bound, bound)
    prototypes = jax.random.uniform(k3, (O, P, C), jnp.float32)
    x = jax.random.normal(k4, (B, I), jnp.float32)
    context = jax.random.uniform(k5, (B, C), jnp.float32)
    return x, context, weight, bias, prototypes


if __name__ == "__main__":
    key = jax.random.PRNGKey(0)
    key1, key2 = jax.random.split(key)

    # 1) Small shapes consistent with the module (O padded to one 128-lane block).
    #    f32 compute path first: exact semantics, tight tolerance.
    B, I, O, C, P = 8, 32, 16, 8, 4
    x, ctx, w, b, proto = _make_inputs(key1, B, I, O, C, P)
    ref = reference(x, ctx, w, b, proto)

    params_f32 = prepare_params(w, b, proto, compute_dtype=jnp.float32)
    out_f32 = jax.block_until_ready(linear_gated_proto_prepared(x, ctx, params_f32))
    assert out_f32.shape == (B, O)
    if not jnp.allclose(out_f32, ref, atol=1e-4, rtol=1e-4):
        raise AssertionError("f32 Pallas output does not match reference")

    # 2) Default bf16 weight/x path (f32 accumulation + f32 gating): the main
    #    HBM-stream lever; looser tolerance for bf16 rounding of the linear term.
    params_bf16 = prepare_params(w, b, proto)          # bf16 weights by default
    out_bf16 = jax.block_until_ready(linear_gated_proto_prepared(x, ctx, params_bf16))
    if not jnp.allclose(out_bf16, ref, atol=5e-2, rtol=5e-2):
        raise AssertionError("bf16 Pallas output diverges from reference")

    # 3) Larger O exercising lane-dense 128-wide tiles and a multi-step grid
    #    (>= 2 steps so both v7x TensorCores participate).
    B2, I2, O2, C2, P2 = 8, 32, 256, 8, 4
    x2, ctx2, w2, b2, proto2 = _make_inputs(key2, B2, I2, O2, C2, P2)
    params2 = prepare_params(w2, b2, proto2, compute_dtype=jnp.float32)
    out2 = jax.block_until_ready(
        linear_gated_proto_prepared(x2, ctx2, params2, tile_o=128))
    ref2 = reference(x2, ctx2, w2, b2, proto2)
    assert out2.shape == (B2, O2)
    if not jnp.allclose(out2, ref2, atol=1e-4, rtol=1e-4):
        raise AssertionError("tiled f32 Pallas output does not match reference")

    print("KERNEL_OK")
</pallas_src>

<mosaic_0001>
module attributes {stable_mosaic.version = 11 : i64} {
  func.func @_gated_proto_kernel(%arg0: i32, %arg1: memref<8x32xf32, #tpu.memory_space<vmem>>, %arg2: memref<8x8xf32, #tpu.memory_space<vmem>>, %arg3: memref<4x128x32xf32, #tpu.memory_space<vmem>>, %arg4: memref<4x128xf32, #tpu.memory_space<vmem>>, %arg5: memref<4x128x8xf32, #tpu.memory_space<vmem>>, %arg6: memref<4x128xf32, #tpu.memory_space<vmem>>, %arg7: memref<8x128xf32, #tpu.memory_space<vmem>>) attributes {dimension_semantics = [#tpu.dimension_semantics<parallel>], iteration_bounds = array<i64: 1>, scalar_prefetch = 0 : i64, scratch_operands = 0 : i64, tpu.core_type = #tpu.core_type<tc>, window_params = [{pipeline_mode = #tpu.pipeline_mode<synchronous>, transform_indices = @transform_0, window_bounds = array<i64: 8, 32>}, {pipeline_mode = #tpu.pipeline_mode<synchronous>, transform_indices = @transform_1, window_bounds = array<i64: 8, 8>}, {transform_indices = @transform_2, window_bounds = array<i64: 4, 128, 32>}, {transform_indices = @transform_3, window_bounds = array<i64: 4, 128>}, {transform_indices = @transform_4, window_bounds = array<i64: 4, 128, 8>}, {transform_indices = @transform_5, window_bounds = array<i64: 4, 128>}, {transform_indices = @transform_6, window_bounds = array<i64: 8, 128>}]} {
    %c0 = arith.constant 0 : index
    %c0_0 = arith.constant 0 : index
    %0 = vector.load %arg1[%c0, %c0_0] : memref<8x32xf32, #tpu.memory_space<vmem>>, vector<8x32xf32>
    %c0_1 = arith.constant 0 : index
    %c0_2 = arith.constant 0 : index
    %1 = vector.load %arg2[%c0_1, %c0_2] : memref<8x8xf32, #tpu.memory_space<vmem>>, vector<8x8xf32>
    %c0_3 = arith.constant 0 : index
    %c0_4 = arith.constant 0 : index
    %c0_5 = arith.constant 0 : index
    %2 = vector.load %arg3[%c0_3, %c0_4, %c0_5] : memref<4x128x32xf32, #tpu.memory_space<vmem>>, vector<4x128x32xf32>
    %3 = vector.shape_cast %2 : vector<4x128x32xf32> to vector<512x32xf32>
    %c0_6 = arith.constant 0 : index
    %c0_7 = arith.constant 0 : index
    %c0_8 = arith.constant 0 : index
    %4 = vector.load %arg5[%c0_6, %c0_7, %c0_8] : memref<4x128x8xf32, #tpu.memory_space<vmem>>, vector<4x128x8xf32>
    %5 = vector.shape_cast %4 : vector<4x128x8xf32> to vector<512x8xf32>
    %c0_9 = arith.constant 0 : index
    %c0_10 = arith.constant 0 : index
    %6 = vector.load %arg4[%c0_9, %c0_10] : memref<4x128xf32, #tpu.memory_space<vmem>>, vector<4x128xf32>
    %c0_11 = arith.constant 0 : index
    %c0_12 = arith.constant 0 : index
    %7 = vector.load %arg6[%c0_11, %c0_12] : memref<4x128xf32, #tpu.memory_space<vmem>>, vector<4x128xf32>
    %cst = arith.constant dense<0.000000e+00> : vector<8x512xf32>
    %8 = tpu.matmul %0, %3, %cst {dimension_numbers = #tpu.dot_dimension_numbers<[1], [1], [0], [0], [0, 0, 1, 0], [], []>} : vector<8x32xf32>, vector<512x32xf32>, vector<8x512xf32> -> vector<8x512xf32>
    %cst_13 = arith.constant dense<0.000000e+00> : vector<8x512xf32>
    %9 = tpu.matmul %1, %5, %cst_13 {dimension_numbers = #tpu.dot_dimension_numbers<[1], [1], [0], [0], [0, 0, 1, 0], [], []>} : vector<8x8xf32>, vector<512x8xf32>, vector<8x512xf32> -> vector<8x512xf32>
    %10 = vector.extract_strided_slice %7 {offsets = [0, 0], sizes = [1, 128], strides = [1, 1]} : vector<4x128xf32> to vector<1x128xf32>
    %11 = vector.extract_strided_slice %9 {offsets = [0, 0], sizes = [8, 128], strides = [1, 1]} : vector<8x512xf32> to vector<8x128xf32>
    %cst_14 = arith.constant 2.000000e+00 : f32
    %12 = vector.broadcast %cst_14 : f32 to vector<8x128xf32>
    %13 = arith.mulf %12, %11 : vector<8x128xf32>
    %14 = vector.broadcast %10 : vector<1x128xf32> to vector<8x128xf32>
    %15 = arith.subf %14, %13 : vector<8x128xf32>
    %16 = vector.extract_strided_slice %8 {offsets = [0, 0], sizes = [8, 128], strides = [1, 1]} : vector<8x512xf32> to vector<8x128xf32>
    %17 = vector.extract_strided_slice %6 {offsets = [0, 0], sizes = [1, 128], strides = [1, 1]} : vector<4x128xf32> to vector<1x128xf32>
    %18 = vector.broadcast %17 : vector<1x128xf32> to vector<8x128xf32>
    %19 = arith.addf %16, %18 : vector<8x128xf32>
    %20 = vector.extract_strided_slice %7 {offsets = [1, 0], sizes = [1, 128], strides = [1, 1]} : vector<4x128xf32> to vector<1x128xf32>
    %21 = vector.extract_strided_slice %9 {offsets = [0, 128], sizes = [8, 128], strides = [1, 1]} : vector<8x512xf32> to vector<8x128xf32>
    %cst_15 = arith.constant 2.000000e+00 : f32
    %22 = vector.broadcast %cst_15 : f32 to vector<8x128xf32>
    %23 = arith.mulf %22, %21 : vector<8x128xf32>
    %24 = vector.broadcast %20 : vector<1x128xf32> to vector<8x128xf32>
    %25 = arith.subf %24, %23 : vector<8x128xf32>
    %26 = vector.extract_strided_slice %8 {offsets = [0, 128], sizes = [8, 128], strides = [1, 1]} : vector<8x512xf32> to vector<8x128xf32>
    %27 = vector.extract_strided_slice %6 {offsets = [1, 0], sizes = [1, 128], strides = [1, 1]} : vector<4x128xf32> to vector<1x128xf32>
    %28 = vector.broadcast %27 : vector<1x128xf32> to vector<8x128xf32>
    %29 = arith.addf %26, %28 : vector<8x128xf32>
    %30 = arith.cmpf olt, %25, %15 : vector<8x128xf32>
    %31 = arith.select %30, %25, %15 : vector<8x128xi1>, vector<8x128xf32>
    %32 = arith.select %30, %29, %19 : vector<8x128xi1>, vector<8x128xf32>
    %33 = vector.extract_strided_slice %7 {offsets = [2, 0], sizes = [1, 128], strides = [1, 1]} : vector<4x128xf32> to vector<1x128xf32>
    %34 = vector.extract_strided_slice %9 {offsets = [0, 256], sizes = [8, 128], strides = [1, 1]} : vector<8x512xf32> to vector<8x128xf32>
    %cst_16 = arith.constant 2.000000e+00 : f32
    %35 = vector.broadcast %cst_16 : f32 to vector<8x128xf32>
    %36 = arith.mulf %35, %34 : vector<8x128xf32>
    %37 = vector.broadcast %33 : vector<1x128xf32> to vector<8x128xf32>
    %38 = arith.subf %37, %36 : vector<8x128xf32>
    %39 = vector.extract_strided_slice %8 {offsets = [0, 256], sizes = [8, 128], strides = [1, 1]} : vector<8x512xf32> to vector<8x128xf32>
    %40 = vector.extract_strided_slice %6 {offsets = [2, 0], sizes = [1, 128], strides = [1, 1]} : vector<4x128xf32> to vector<1x128xf32>
    %41 = vector.broadcast %40 : vector<1x128xf32> to vector<8x128xf32>
    %42 = arith.addf %39, %41 : vector<8x128xf32>
    %43 = arith.cmpf olt, %38, %31 : vector<8x128xf32>
    %44 = arith.select %43, %38, %31 : vector<8x128xi1>, vector<8x128xf32>
    %45 = arith.select %43, %42, %32 : vector<8x128xi1>, vector<8x128xf32>
    %46 = vector.extract_strided_slice %7 {offsets = [3, 0], sizes = [1, 128], strides = [1, 1]} : vector<4x128xf32> to vector<1x128xf32>
    %47 = vector.extract_strided_slice %9 {offsets = [0, 384], sizes = [8, 128], strides = [1, 1]} : vector<8x512xf32> to vector<8x128xf32>
    %cst_17 = arith.constant 2.000000e+00 : f32
    %48 = vector.broadcast %cst_17 : f32 to vector<8x128xf32>
    %49 = arith.mulf %48, %47 : vector<8x128xf32>
    %50 = vector.broadcast %46 : vector<1x128xf32> to vector<8x128xf32>
    %51 = arith.subf %50, %49 : vector<8x128xf32>
    %52 = vector.extract_strided_slice %8 {offsets = [0, 384], sizes = [8, 128], strides = [1, 1]} : vector<8x512xf32> to vector<8x128xf32>
    %53 = vector.extract_strided_slice %6 {offsets = [3, 0], sizes = [1, 128], strides = [1, 1]} : vector<4x128xf32> to vector<1x128xf32>
    %54 = vector.broadcast %53 : vector<1x128xf32> to vector<8x128xf32>
    %55 = arith.addf %52, %54 : vector<8x128xf32>
    %56 = arith.cmpf olt, %51, %44 : vector<8x128xf32>
    %57 = arith.select %56, %55, %45 : vector<8x128xi1>, vector<8x128xf32>
    %c0_18 = arith.constant 0 : index
    %c0_19 = arith.constant 0 : index
    %58 = vector.load %arg7[%c0_18, %c0_19] : memref<8x128xf32, #tpu.memory_space<vmem>>, vector<8x128xf32>
    tpu.vector_store %arg7[%c0_18, %c0_19], %57 {strides = array<i32>} : memref<8x128xf32, #tpu.memory_space<vmem>>, vector<8x128xf32>,
    return
  }
  func.func @transform_0(%arg0: i32) -> (i32, i32) {
    %c0_i32 = arith.constant 0 : i32
    %c0_i32_0 = arith.constant 0 : i32
    %c0_i32_1 = arith.constant 0 : i32
    return %c0_i32, %c0_i32_0 : i32, i32
  }
  func.func @transform_1(%arg0: i32) -> (i32, i32) {
    %c0_i32 = arith.constant 0 : i32
    %c0_i32_0 = arith.constant 0 : i32
    %c0_i32_1 = arith.constant 0 : i32
    return %c0_i32, %c0_i32_0 : i32, i32
  }
  func.func @transform_2(%arg0: i32) -> (i32, i32, i32) {
    %c0_i32 = arith.constant 0 : i32
    %c0_i32_0 = arith.constant 0 : i32
    %c0_i32_1 = arith.constant 0 : i32
    return %c0_i32, %arg0, %c0_i32_0 : i32, i32, i32
  }
  func.func @transform_3(%arg0: i32) -> (i32, i32) {
    %c0_i32 = arith.constant 0 : i32
    %c0_i32_0 = arith.constant 0 : i32
    return %c0_i32, %arg0 : i32, i32
  }
  func.func @transform_4(%arg0: i32) -> (i32, i32, i32) {
    %c0_i32 = arith.constant 0 : i32
    %c0_i32_0 = arith.constant 0 : i32
    %c0_i32_1 = arith.constant 0 : i32
    return %c0_i32, %arg0, %c0_i32_0 : i32, i32, i32
  }
  func.func @transform_5(%arg0: i32) -> (i32, i32) {
    %c0_i32 = arith.constant 0 : i32
    %c0_i32_0 = arith.constant 0 : i32
    return %c0_i32, %arg0 : i32, i32
  }
  func.func @transform_6(%arg0: i32) -> (i32, i32) {
    %c0_i32 = arith.constant 0 : i32
    %c0_i32_0 = arith.constant 0 : i32
    return %c0_i32, %arg0 : i32, i32
  }
}

</mosaic_0001>

<llo_original>
// kernel: tpu_custom_call.1
$region0: #{tpu_custom_call.1}
  #allocation0 [shape = 'u32[]', space=smem, size = 0x4, offset = 0x4, fixed_abs, tag = 'smem constant byte address 0x4 - core index']
  #allocation1 [shape = 'u32[144,128]{1,0:T(1,128)}', space=vmem, size = 0x12000, scoped, tag = 'internal scratch']
  %s0 = inlined_call_operand.vmem [shape: f32[8,32], index: 0, kind: input, shape index: {}]
  %s1 = inlined_call_operand.vmem [shape: f32[8,8], index: 1, kind: input, shape index: {}]
  %s2 = inlined_call_operand.vmem [shape: f32[4,128,32], index: 2, kind: input, shape index: {}]
  %s3 = inlined_call_operand.vmem [shape: f32[4,128], index: 3, kind: input, shape index: {}]
  %s4 = inlined_call_operand.vmem [shape: f32[4,128,8], index: 4, kind: input, shape index: {}]
  %s5 = inlined_call_operand.vmem [shape: f32[4,128], index: 5, kind: input, shape index: {}]
  %s6 = inlined_call_operand.hbm [shape: f32[8,128], index: 6, kind: output, shape index: {}]
  %s7 = sld [smem:[#allocation0]]
  $region34: #{tpu_custom_call.1} parent=0
    _
  %s9 = ssub.s32 1, %s7
  %s10 = scalar_select 0, %s9, %s7
  $region1: #{tpu_custom_call.1} parent=0
    #allocation2 [shape = 'u8[4096]{0}', space=vmem, size = 0x1000, scoped, tag = 'output window, operand 0, single buffered']
    #allocation3 [shape = 's32[1]{0}', space=sflag, size = 0x4, scoped, tag = 'scoped memory for tpu_custom_call.1']
    %11 = vsyncpa [#allocation3], 0
    // Predicated region
    $region2: #{tpu_custom_call.1} parent=1 // pred_check
      _
    $region3: #{tpu_custom_call.1} parent=1 // pred_check_branch
      %13 = sbr.rel (0) target = $region5
    $region4: #{tpu_custom_call.1} parent=1 // pred_region
      _
    $region5: #{tpu_custom_call.1} parent=1 // pred_fallthru
      _
    // Predicated region
    $region6: #{tpu_custom_call.1} parent=1 // pred_check
      _
    $region7: #{tpu_custom_call.1} parent=1 // pred_check_branch
      %15 = sbr.rel (0) target = $region9
    $region8: #{tpu_custom_call.1} parent=1 // pred_region
      _
    $region9: #{tpu_custom_call.1} parent=1 // pred_fallthru
      _
    // Predicated region
    $region10: #{tpu_custom_call.1} parent=1 // pred_check
      _
    $region11: #{tpu_custom_call.1} parent=1 // pred_check_branch
      %17 = sbr.rel (0) target = $region13
    $region12: #{tpu_custom_call.1} parent=1 // pred_region
      _
    $region13: #{tpu_custom_call.1} parent=1 // pred_fallthru
      _
    // Predicated region
    $region14: #{tpu_custom_call.1} parent=1 // pred_check
      _
    $region15: #{tpu_custom_call.1} parent=1 // pred_check_branch
      %19 = sbr.rel (0) target = $region17
    $region16: #{tpu_custom_call.1} parent=1 // pred_region
      _
    $region17: #{tpu_custom_call.1} parent=1 // pred_fallthru
      _
    // Predicated region
    $region18: #{tpu_custom_call.1} parent=1 // pred_check
      _
    $region19: #{tpu_custom_call.1} parent=1 // pred_check_branch
      %21 = sbr.rel (0) target = $region21
    $region20: #{tpu_custom_call.1} parent=1 // pred_region
      _
    $region21: #{tpu_custom_call.1} parent=1 // pred_fallthru
      _
    // Predicated region
    $region22: #{tpu_custom_call.1} parent=1 // pred_check
      _
    $region23: #{tpu_custom_call.1} parent=1 // pred_check_branch
      %23 = sbr.rel (0) target = $region25
    $region24: #{tpu_custom_call.1} parent=1 // pred_region
      _
    $region25: #{tpu_custom_call.1} parent=1 // pred_fallthru
      _
    %v24 = vld [vmem:[%s0] sm:$0xff]
    %v25 = vld [vmem:[%s1] sm:$0xff]
    %v26 = vld [vmem:[%s2] sm:$0xff]
    %v27 = vld [vmem:[%s2 + $0x8] sm:$0xff]
    %v28 = vld [vmem:[%s2 + $0x10] sm:$0xff]
    %v29 = vld [vmem:[%s2 + $0x18] sm:$0xff]
    %v30 = vld [vmem:[%s2 + $0x20] sm:$0xff]
    %v31 = vld [vmem:[%s2 + $0x28] sm:$0xff]
    %v32 = vld [vmem:[%s2 + $0x30] sm:$0xff]
    %v33 = vld [vmem:[%s2 + $0x38] sm:$0xff]
    %v34 = vld [vmem:[%s2 + $0x40] sm:$0xff]
    %v35 = vld [vmem:[%s2 + $0x48] sm:$0xff]
    %v36 = vld [vmem:[%s2 + $0x50] sm:$0xff]
    %v37 = vld [vmem:[%s2 + $0x58] sm:$0xff]
    %v38 = vld [vmem:[%s2 + $0x60] sm:$0xff]
    %v39 = vld [vmem:[%s2 + $0x68] sm:$0xff]
    %v40 = vld [vmem:[%s2 + $0x70] sm:$0xff]
    %v41 = vld [vmem:[%s2 + $0x78] sm:$0xff]
    %v42 = vld [vmem:[%s2 + $0x80] sm:$0xff]
    %v43 = vld [vmem:[%s2 + $0x88] sm:$0xff]
    %v44 = vld [vmem:[%s2 + $0x90] sm:$0xff]
    %v45 = vld [vmem:[%s2 + $0x98] sm:$0xff]
    %v46 = vld [vmem:[%s2 + $0xa0] sm:$0xff]
    %v47 = vld [vmem:[%s2 + $0xa8] sm:$0xff]
    %v48 = vld [vmem:[%s2 + $0xb0] sm:$0xff]
    %v49 = vld [vmem:[%s2 + $0xb8] sm:$0xff]
    %v50 = vld [vmem:[%s2 + $0xc0] sm:$0xff]
    %v51 = vld [vmem:[%s2 + $0xc8] sm:$0xff]
    %v52 = vld [vmem:[%s2 + $0xd0] sm:$0xff]
    %v53 = vld [vmem:[%s2 + $0xd8] sm:$0xff]
    %v54 = vld [vmem:[%s2 + $0xe0] sm:$0xff]
    %v55 = vld [vmem:[%s2 + $0xe8] sm:$0xff]
    %v56 = vld [vmem:[%s2 + $0xf0] sm:$0xff]
    %v57 = vld [vmem:[%s2 + $0xf8] sm:$0xff]
    %v58 = vld [vmem:[%s2 + $0x100] sm:$0xff]
    %v59 = vld [vmem:[%s2 + $0x108] sm:$0xff]
    %v60 = vld [vmem:[%s2 + $0x110] sm:$0xff]
    %v61 = vld [vmem:[%s2 + $0x118] sm:$0xff]
    %v62 = vld [vmem:[%s2 + $0x120] sm:$0xff]
    %v63 = vld [vmem:[%s2 + $0x128] sm:$0xff]
    %v64 = vld [vmem:[%s2 + $0x130] sm:$0xff]
    %v65 = vld [vmem:[%s2 + $0x138] sm:$0xff]
    %v66 = vld [vmem:[%s2 + $0x140] sm:$0xff]
    %v67 = vld [vmem:[%s2 + $0x148] sm:$0xff]
    %v68 = vld [vmem:[%s2 + $0x150] sm:$0xff]
    %v69 = vld [vmem:[%s2 + $0x158] sm:$0xff]
    %v70 = vld [vmem:[%s2 + $0x160] sm:$0xff]
    %v71 = vld [vmem:[%s2 + $0x168] sm:$0xff]
    %v72 = vld [vmem:[%s2 + $0x170] sm:$0xff]
    %v73 = vld [vmem:[%s2 + $0x178] sm:$0xff]
    %v74 = vld [vmem:[%s2 + $0x180] sm:$0xff]
    %v75 = vld [vmem:[%s2 + $0x188] sm:$0xff]
    %v76 = vld [vmem:[%s2 + $0x190] sm:$0xff]
    %v77 = vld [vmem:[%s2 + $0x198] sm:$0xff]
    %v78 = vld [vmem:[%s2 + $0x1a0] sm:$0xff]
    %v79 = vld [vmem:[%s2 + $0x1a8] sm:$0xff]
    %v80 = vld [vmem:[%s2 + $0x1b0] sm:$0xff]
    %v81 = vld [vmem:[%s2 + $0x1b8] sm:$0xff]
    %v82 = vld [vmem:[%s2 + $0x1c0] sm:$0xff]
    %v83 = vld [vmem:[%s2 + $0x1c8] sm:$0xff]
    %v84 = vld [vmem:[%s2 + $0x1d0] sm:$0xff]
    %v85 = vld [vmem:[%s2 + $0x1d8] sm:$0xff]
    %v86 = vld [vmem:[%s2 + $0x1e0] sm:$0xff]
    %v87 = vld [vmem:[%s2 + $0x1e8] sm:$0xff]
    %v88 = vld [vmem:[%s2 + $0x1f0] sm:$0xff]
    %v89 = vld [vmem:[%s2 + $0x1f8] sm:$0xff]
    %v90 = vld [vmem:[%s4] sm:$0xff]
    %v91 = vld [vmem:[%s4 + $0x8] sm:$0xff]
    %v92 = vld [vmem:[%s4 + $0x10] sm:$0xff]
    %v93 = vld [vmem:[%s4 + $0x18] sm:$0xff]
    %v94 = vld [vmem:[%s4 + $0x20] sm:$0xff]
    %v95 = vld [vmem:[%s4 + $0x28] sm:$0xff]
    %v96 = vld [vmem:[%s4 + $0x30] sm:$0xff]
    %v97 = vld [vmem:[%s4 + $0x38] sm:$0xff]
    %v98 = vld [vmem:[%s4 + $0x40] sm:$0xff]
    %v99 = vld [vmem:[%s4 + $0x48] sm:$0xff]
    %v100 = vld [vmem:[%s4 + $0x50] sm:$0xff]
    %v101 = vld [vmem:[%s4 + $0x58] sm:$0xff]
    %v102 = vld [vmem:[%s4 + $0x60] sm:$0xff]
    %v103 = vld [vmem:[%s4 + $0x68] sm:$0xff]
    %v104 = vld [vmem:[%s4 + $0x70] sm:$0xff]
    %v105 = vld [vmem:[%s4 + $0x78] sm:$0xff]
    %v106 = vld [vmem:[%s4 + $0x80] sm:$0xff]
    %v107 = vld [vmem:[%s4 + $0x88] sm:$0xff]
    %v108 = vld [vmem:[%s4 + $0x90] sm:$0xff]
    %v109 = vld [vmem:[%s4 + $0x98] sm:$0xff]
    %v110 = vld [vmem:[%s4 + $0xa0] sm:$0xff]
    %v111 = vld [vmem:[%s4 + $0xa8] sm:$0xff]
    %v112 = vld [vmem:[%s4 + $0xb0] sm:$0xff]
    %v113 = vld [vmem:[%s4 + $0xb8] sm:$0xff]
    %v114 = vld [vmem:[%s4 + $0xc0] sm:$0xff]
    %v115 = vld [vmem:[%s4 + $0xc8] sm:$0xff]
    %v116 = vld [vmem:[%s4 + $0xd0] sm:$0xff]
    %v117 = vld [vmem:[%s4 + $0xd8] sm:$0xff]
    %v118 = vld [vmem:[%s4 + $0xe0] sm:$0xff]
    %v119 = vld [vmem:[%s4 + $0xe8] sm:$0xff]
    %v120 = vld [vmem:[%s4 + $0xf0] sm:$0xff]
    %v121 = vld [vmem:[%s4 + $0xf8] sm:$0xff]
    %v122 = vld [vmem:[%s4 + $0x100] sm:$0xff]
    %v123 = vld [vmem:[%s4 + $0x108] sm:$0xff]
    %v124 = vld [vmem:[%s4 + $0x110] sm:$0xff]
    %v125 = vld [vmem:[%s4 + $0x118] sm:$0xff]
    %v126 = vld [vmem:[%s4 + $0x120] sm:$0xff]
    %v127 = vld [vmem:[%s4 + $0x128] sm:$0xff]
    %v128 = vld [vmem:[%s4 + $0x130] sm:$0xff]
    %v129 = vld [vmem:[%s4 + $0x138] sm:$0xff]
    %v130 = vld [vmem:[%s4 + $0x140] sm:$0xff]
    %v131 = vld [vmem:[%s4 + $0x148] sm:$0xff]
    %v132 = vld [vmem:[%s4 + $0x150] sm:$0xff]
    %v133 = vld [vmem:[%s4 + $0x158] sm:$0xff]
    %v134 = vld [vmem:[%s4 + $0x160] sm:$0xff]
    %v135 = vld [vmem:[%s4 + $0x168] sm:$0xff]
    %v136 = vld [vmem:[%s4 + $0x170] sm:$0xff]
    %v137 = vld [vmem:[%s4 + $0x178] sm:$0xff]
    %v138 = vld [vmem:[%s4 + $0x180] sm:$0xff]
    %v139 = vld [vmem:[%s4 + $0x188] sm:$0xff]
    %v140 = vld [vmem:[%s4 + $0x190] sm:$0xff]
    %v141 = vld [vmem:[%s4 + $0x198] sm:$0xff]
    %v142 = vld [vmem:[%s4 + $0x1a0] sm:$0xff]
    %v143 = vld [vmem:[%s4 + $0x1a8] sm:$0xff]
    %v144 = vld [vmem:[%s4 + $0x1b0] sm:$0xff]
    %v145 = vld [vmem:[%s4 + $0x1b8] sm:$0xff]
    %v146 = vld [vmem:[%s4 + $0x1c0] sm:$0xff]
    %v147 = vld [vmem:[%s4 + $0x1c8] sm:$0xff]
    %v148 = vld [vmem:[%s4 + $0x1d0] sm:$0xff]
    %v149 = vld [vmem:[%s4 + $0x1d8] sm:$0xff]
    %v150 = vld [vmem:[%s4 + $0x1e0] sm:$0xff]
    %v151 = vld [vmem:[%s4 + $0x1e8] sm:$0xff]
    %v152 = vld [vmem:[%s4 + $0x1f0] sm:$0xff]
    %v153 = vld [vmem:[%s4 + $0x1f8] sm:$0xff]
    %v154 = vld [vmem:[%s3] sm:$0xf]
    %v155 = vld [vmem:[%s5] sm:$0xf]
    %vm156 = vcmask 261120
    %v158 = vsel %vm156, %v24, 0
    %v161 = vsel %vm156, %v26, 0
    %v164 = vsel %vm156, %v27, 0
    %v167 = vsel %vm156, %v28, 0
    %v170 = vsel %vm156, %v29, 0
    %v173 = vsel %vm156, %v30, 0
    %v176 = vsel %vm156, %v31, 0
    %v179 = vsel %vm156, %v32, 0
    %v182 = vsel %vm156, %v33, 0
    %v185 = vsel %vm156, %v34, 0
    %v188 = vsel %vm156, %v35, 0
    %v191 = vsel %vm156, %v36, 0
    %v194 = vsel %vm156, %v37, 0
    %v197 = vsel %vm156, %v38, 0
    %v200 = vsel %vm156, %v39, 0
    %v203 = vsel %vm156, %v40, 0
    %v206 = vsel %vm156, %v41, 0
    %v209 = vsel %vm156, %v42, 0
    %v212 = vsel %vm156, %v43, 0
    %v215 = vsel %vm156, %v44, 0
    %v218 = vsel %vm156, %v45, 0
    %v221 = vsel %vm156, %v46, 0
    %v224 = vsel %vm156, %v47, 0
    %v227 = vsel %vm156, %v48, 0
    %v230 = vsel %vm156, %v49, 0
    %v233 = vsel %vm156, %v50, 0
    %v236 = vsel %vm156, %v51, 0
    %v239 = vsel %vm156, %v52, 0
    %v242 = vsel %vm156, %v53, 0
    %v245 = vsel %vm156, %v54, 0
    %v248 = vsel %vm156, %v55, 0
    %v251 = vsel %vm156, %v56, 0
    %v254 = vsel %vm156, %v57, 0
    %v257 = vsel %vm156, %v58, 0
    %v260 = vsel %vm156, %v59, 0
    %v263 = vsel %vm156, %v60, 0
    %v266 = vsel %vm156, %v61, 0
    %v269 = vsel %vm156, %v62, 0
    %v272 = vsel %vm156, %v63, 0
    %v275 = vsel %vm156, %v64, 0
    %v278 = vsel %vm156, %v65, 0
    %v281 = vsel %vm156, %v66, 0
    %v284 = vsel %vm156, %v67, 0
    %v287 = vsel %vm156, %v68, 0
    %v290 = vsel %vm156, %v69, 0
    %v293 = vsel %vm156, %v70, 0
    %v296 = vsel %vm156, %v71, 0
    %v299 = vsel %vm156, %v72, 0
    %v302 = vsel %vm156, %v73, 0
    %v305 = vsel %vm156, %v74, 0
    %v308 = vsel %vm156, %v75, 0
    %v311 = vsel %vm156, %v76, 0
    %v314 = vsel %vm156, %v77, 0
    %v317 = vsel %vm156, %v78, 0
    %v320 = vsel %vm156, %v79, 0
    %v323 = vsel %vm156, %v80, 0
    %v326 = vsel %vm156, %v81, 0
    %v329 = vsel %vm156, %v82, 0
    %v332 = vsel %vm156, %v83, 0
    %v335 = vsel %vm156, %v84, 0
    %v338 = vsel %vm156, %v85, 0
    %v341 = vsel %vm156, %v86, 0
    %v344 = vsel %vm156, %v87, 0
    %v347 = vsel %vm156, %v88, 0
    %v350 = vsel %vm156, %v89, 0
    %352 = vmatprep.subr.mxu0 0.0
    %353 = vmatpush1.xpose.msra.mxu0 %v206
    %354 = vmatprep.subr.mxu0 0.0
    %355 = vmatpush1.xpose.msra.mxu0 %v203
    %356 = vmatprep.subr.mxu0 0.0
    %357 = vmatpush1.xpose.msra.mxu0 %v200
    %358 = vmatprep.subr.mxu0 0.0
    %359 = vmatpush1.xpose.msra.mxu0 %v197
    %360 = vmatprep.subr.mxu0 0.0
    %361 = vmatpush1.xpose.msra.mxu0 %v194
    %362 = vmatprep.subr.mxu0 0.0
    %363 = vmatpush1.xpose.msra.mxu0 %v191
    %364 = vmatprep.subr.mxu0 0.0
    %365 = vmatpush1.xpose.msra.mxu0 %v188
    %366 = vmatprep.subr.mxu0 0.0
    %367 = vmatpush1.xpose.msra.mxu0 %v185
    %368 = vmatprep.subr.mxu0 0.0
    %369 = vmatpush1.xpose.msra.mxu0 %v182
    %370 = vmatprep.subr.mxu0 0.0
    %371 = vmatpush1.xpose.msra.mxu0 %v179
    %372 = vmatprep.subr.mxu0 0.0
    %373 = vmatpush1.xpose.msra.mxu0 %v176
    %374 = vmatprep.subr.mxu0 0.0
    %375 = vmatpush1.xpose.msra.mxu0 %v173
    %376 = vmatprep.subr.mxu0 0.0
    %377 = vmatpush1.xpose.msra.mxu0 %v170
    %378 = vmatprep.subr.mxu0 0.0
    %379 = vmatpush1.xpose.msra.mxu0 %v167
    %380 = vmatprep.subr.mxu0 0.0
    %381 = vmatpush1.xpose.msra.mxu0 %v164
    %382 = vmatprep.subr.mxu0 0.0
    %383 = vmatpush1.xpose.msra.mxu0 %v161
    %384 = vmatprep.subr.mxu0 0.0
    %385 = vmatpush2.xpose.msra.mxu0 %v254
    %386 = vmatprep.subr.mxu0 0.0
    %387 = vmatpush2.xpose.msra.mxu0 %v251
    %388 = vmatprep.subr.mxu0 0.0
    %389 = vmatpush2.xpose.msra.mxu0 %v248
    %390 = vmatprep.subr.mxu0 0.0
    %391 = vmatpush2.xpose.msra.mxu0 %v245
    %392 = vmatprep.subr.mxu0 0.0
    %393 = vmatpush2.xpose.msra.mxu0 %v242
    %394 = vmatprep.subr.mxu0 0.0
    %395 = vmatpush2.xpose.msra.mxu0 %v239
    %396 = vmatprep.subr.mxu0 0.0
    %397 = vmatpush2.xpose.msra.mxu0 %v236
    %398 = vmatprep.subr.mxu0 0.0
    %399 = vmatpush2.xpose.msra.mxu0 %v233
    %400 = vmatprep.subr.mxu0 0.0
    %401 = vmatpush2.xpose.msra.mxu0 %v230
    %402 = vmatprep.subr.mxu0 0.0
    %403 = vmatpush2.xpose.msra.mxu0 %v227
    %404 = vmatprep.subr.mxu0 0.0
    %405 = vmatpush2.xpose.msra.mxu0 %v224
    %406 = vmatprep.subr.mxu0 0.0
    %407 = vmatpush2.xpose.msra.mxu0 %v221
    %408 = vmatprep.subr.mxu0 0.0
    %409 = vmatpush2.xpose.msra.mxu0 %v218
    %410 = vmatprep.subr.mxu0 0.0
    %411 = vmatpush2.xpose.msra.mxu0 %v215
    %412 = vmatprep.subr.mxu0 0.0
    %413 = vmatpush2.xpose.msra.mxu0 %v212
    %414 = vmatprep.subr.mxu0 0.0
    %415 = vmatpush2.xpose.msra.mxu0 %v209
    %416 = vmatprep.mubr.f32.mxu0 0.0
    %417 = vmatmul.mubr.f32.gmra.mxu0 %v158
    %v418 = vpop.f32.mrf.mxu0
    %v419 = vadd.f32 0.0, %v418
    %v420 = vpop.f32.mrf.mxu0
    %v421 = vadd.f32 0.0, %v420
    %422 = vdwg.mxu0
    %423 = vmatprep.subr.mxu0 0.0
    %424 = vmatpush1.xpose.msra.mxu0 %v302
    %425 = vmatprep.subr.mxu0 0.0
    %426 = vmatpush1.xpose.msra.mxu0 %v299
    %427 = vmatprep.subr.mxu0 0.0
    %428 = vmatpush1.xpose.msra.mxu0 %v296
    %429 = vmatprep.subr.mxu0 0.0
    %430 = vmatpush1.xpose.msra.mxu0 %v293
    %431 = vmatprep.subr.mxu0 0.0
    %432 = vmatpush1.xpose.msra.mxu0 %v290
    %433 = vmatprep.subr.mxu0 0.0
    %434 = vmatpush1.xpose.msra.mxu0 %v287
    %435 = vmatprep.subr.mxu0 0.0
    %436 = vmatpush1.xpose.msra.mxu0 %v284
    %437 = vmatprep.subr.mxu0 0.0
    %438 = vmatpush1.xpose.msra.mxu0 %v281
    %439 = vmatprep.subr.mxu0 0.0
    %440 = vmatpush1.xpose.msra.mxu0 %v278
    %441 = vmatprep.subr.mxu0 0.0
    %442 = vmatpush1.xpose.msra.mxu0 %v275
    %443 = vmatprep.subr.mxu0 0.0
    %444 = vmatpush1.xpose.msra.mxu0 %v272
    %445 = vmatprep.subr.mxu0 0.0
    %446 = vmatpush1.xpose.msra.mxu0 %v269
    %447 = vmatprep.subr.mxu0 0.0
    %448 = vmatpush1.xpose.msra.mxu0 %v266
    %449 = vmatprep.subr.mxu0 0.0
    %450 = vmatpush1.xpose.msra.mxu0 %v263
    %451 = vmatprep.subr.mxu0 0.0
    %452 = vmatpush1.xpose.msra.mxu0 %v260
    %453 = vmatprep.subr.mxu0 0.0
    %454 = vmatpush1.xpose.msra.mxu0 %v257
    %455 = vmatprep.subr.mxu0 0.0
    %456 = vmatpush2.xpose.msra.mxu0 %v350
    %457 = vmatprep.subr.mxu0 0.0
    %458 = vmatpush2.xpose.msra.mxu0 %v347
    %459 = vmatprep.subr.mxu0 0.0
    %460 = vmatpush2.xpose.msra.mxu0 %v344
    %461 = vmatprep.subr.mxu0 0.0
    %462 = vmatpush2.xpose.msra.mxu0 %v341
    %463 = vmatprep.subr.mxu0 0.0
    %464 = vmatpush2.xpose.msra.mxu0 %v338
    %465 = vmatprep.subr.mxu0 0.0
    %466 = vmatpush2.xpose.msra.mxu0 %v335
    %467 = vmatprep.subr.mxu0 0.0
    %468 = vmatpush2.xpose.msra.mxu0 %v332
    %469 = vmatprep.subr.mxu0 0.0
    %470 = vmatpush2.xpose.msra.mxu0 %v329
    %471 = vmatprep.subr.mxu0 0.0
    %472 = vmatpush2.xpose.msra.mxu0 %v326
    %473 = vmatprep.subr.mxu0 0.0
    %474 = vmatpush2.xpose.msra.mxu0 %v323
    %475 = vmatprep.subr.mxu0 0.0
    %476 = vmatpush2.xpose.msra.mxu0 %v320
    %477 = vmatprep.subr.mxu0 0.0
    %478 = vmatpush2.xpose.msra.mxu0 %v317
    %479 = vmatprep.subr.mxu0 0.0
    %480 = vmatpush2.xpose.msra.mxu0 %v314
    %481 = vmatprep.subr.mxu0 0.0
    %482 = vmatpush2.xpose.msra.mxu0 %v311
    %483 = vmatprep.subr.mxu0 0.0
    %484 = vmatpush2.xpose.msra.mxu0 %v308
    %485 = vmatprep.subr.mxu0 0.0
    %486 = vmatpush2.xpose.msra.mxu0 %v305
    %487 = vmatprep.mubr.f32.mxu0 0.0
    %488 = vmatmul.mubr.f32.gmra.mxu0 %v158
    %v489 = vpop.f32.mrf.mxu0
    %v490 = vadd.f32 0.0, %v489
    %v491 = vpop.f32.mrf.mxu0
    %v492 = vadd.f32 0.0, %v491
    %493 = vdwg.mxu0
    %vm494 = vcmask 64512
    %v496 = vsel %vm494, %v25, 0
    %v499 = vsel %vm494, %v90, 0
    %v502 = vsel %vm494, %v91, 0
    %v505 = vsel %vm494, %v92, 0
    %v508 = vsel %vm494, %v93, 0
    %v511 = vsel %vm494, %v94, 0
    %v514 = vsel %vm494, %v95, 0
    %v517 = vsel %vm494, %v96, 0
    %v520 = vsel %vm494, %v97, 0
    %v523 = vsel %vm494, %v98, 0
    %v526 = vsel %vm494, %v99, 0
    %v529 = vsel %vm494, %v100, 0
    %v532 = vsel %vm494, %v101, 0
    %v535 = vsel %vm494, %v102, 0
    %v538 = vsel %vm494, %v103, 0
    %v541 = vsel %vm494, %v104, 0
    %v544 = vsel %vm494, %v105, 0
    %v547 = vsel %vm494, %v106, 0
    %v550 = vsel %vm494, %v107, 0
    %v553 = vsel %vm494, %v108, 0
    %v556 = vsel %vm494, %v109, 0
    %v559 = vsel %vm494, %v110, 0
    %v562 = vsel %vm494, %v111, 0
    %v565 = vsel %vm494, %v112, 0
    %v568 = vsel %vm494, %v113, 0
    %v571 = vsel %vm494, %v114, 0
    %v574 = vsel %vm494, %v115, 0
    %v577 = vsel %vm494, %v116, 0
    %v580 = vsel %vm494, %v117, 0
    %v583 = vsel %vm494, %v118, 0
    %v586 = vsel %vm494, %v119, 0
    %v589 = vsel %vm494, %v120, 0
    %v592 = vsel %vm494, %v121, 0
    %v595 = vsel %vm494, %v122, 0
    %v598 = vsel %vm494, %v123, 0
    %v601 = vsel %vm494, %v124, 0
    %v604 = vsel %vm494, %v125, 0
    %v607 = vsel %vm494, %v126, 0
    %v610 = vsel %vm494, %v127, 0
    %v613 = vsel %vm494, %v128, 0
    %v616 = vsel %vm494, %v129, 0
    %v619 = vsel %vm494, %v130, 0
    %v622 = vsel %vm494, %v131, 0
    %v625 = vsel %vm494, %v132, 0
    %v628 = vsel %vm494, %v133, 0
    %v631 = vsel %vm494, %v134, 0
    %v634 = vsel %vm494, %v135, 0
    %v637 = vsel %vm494, %v136, 0
    %v640 = vsel %vm494, %v137, 0
    %v643 = vsel %vm494, %v138, 0
    %v646 = vsel %vm494, %v139, 0
    %v649 = vsel %vm494, %v140, 0
    %v652 = vsel %vm494, %v141, 0
    %v655 = vsel %vm494, %v142, 0
    %v658 = vsel %vm494, %v143, 0
    %v661 = vsel %vm494, %v144, 0
    %v664 = vsel %vm494, %v145, 0
    %v667 = vsel %vm494, %v146, 0
    %v670 = vsel %vm494, %v147, 0
    %v673 = vsel %vm494, %v148, 0
    %v676 = vsel %vm494, %v149, 0
    %v679 = vsel %vm494, %v150, 0
    %v682 = vsel %vm494, %v151, 0
    %v685 = vsel %vm494, %v152, 0
    %v688 = vsel %vm494, %v153, 0
    %690 = vmatprep.subr.mxu0 0.0
    %691 = vmatpush1.xpose.msra.mxu0 %v544
    %692 = vmatprep.subr.mxu0 0.0
    %693 = vmatpush1.xpose.msra.mxu0 %v541
    %694 = vmatprep.subr.mxu0 0.0
    %695 = vmatpush1.xpose.msra.mxu0 %v538
    %696 = vmatprep.subr.mxu0 0.0
    %697 = vmatpush1.xpose.msra.mxu0 %v535
    %698 = vmatprep.subr.mxu0 0.0
    %699 = vmatpush1.xpose.msra.mxu0 %v532
    %700 = vmatprep.subr.mxu0 0.0
    %701 = vmatpush1.xpose.msra.mxu0 %v529
    %702 = vmatprep.subr.mxu0 0.0
    %703 = vmatpush1.xpose.msra.mxu0 %v526
    %704 = vmatprep.subr.mxu0 0.0
    %705 = vmatpush1.xpose.msra.mxu0 %v523
    %706 = vmatprep.subr.mxu0 0.0
    %707 = vmatpush1.xpose.msra.mxu0 %v520
    %708 = vmatprep.subr.mxu0 0.0
    %709 = vmatpush1.xpose.msra.mxu0 %v517
    %710 = vmatprep.subr.mxu0 0.0
    %711 = vmatpush1.xpose.msra.mxu0 %v514
    %712 = vmatprep.subr.mxu0 0.0
    %713 = vmatpush1.xpose.msra.mxu0 %v511
    %714 = vmatprep.subr.mxu0 0.0
    %715 = vmatpush1.xpose.msra.mxu0 %v508
    %716 = vmatprep.subr.mxu0 0.0
    %717 = vmatpush1.xpose.msra.mxu0 %v505
    %718 = vmatprep.subr.mxu0 0.0
    %719 = vmatpush1.xpose.msra.mxu0 %v502
    %720 = vmatprep.subr.mxu0 0.0
    %721 = vmatpush1.xpose.msra.mxu0 %v499
    %722 = vmatprep.subr.mxu0 0.0
    %723 = vmatpush2.xpose.msra.mxu0 %v592
    %724 = vmatprep.subr.mxu0 0.0
    %725 = vmatpush2.xpose.msra.mxu0 %v589
    %726 = vmatprep.subr.mxu0 0.0
    %727 = vmatpush2.xpose.msra.mxu0 %v586
    %728 = vmatprep.subr.mxu0 0.0
    %729 = vmatpush2.xpose.msra.mxu0 %v583
    %730 = vmatprep.subr.mxu0 0.0
    %731 = vmatpush2.xpose.msra.mxu0 %v580
    %732 = vmatprep.subr.mxu0 0.0
    %733 = vmatpush2.xpose.msra.mxu0 %v577
    %734 = vmatprep.subr.mxu0 0.0
    %735 = vmatpush2.xpose.msra.mxu0 %v574
    %736 = vmatprep.subr.mxu0 0.0
    %737 = vmatpush2.xpose.msra.mxu0 %v571
    %738 = vmatprep.subr.mxu0 0.0
    %739 = vmatpush2.xpose.msra.mxu0 %v568
    %740 = vmatprep.subr.mxu0 0.0
    %741 = vmatpush2.xpose.msra.mxu0 %v565
    %742 = vmatprep.subr.mxu0 0.0
    %743 = vmatpush2.xpose.msra.mxu0 %v562
    %744 = vmatprep.subr.mxu0 0.0
    %745 = vmatpush2.xpose.msra.mxu0 %v559
    %746 = vmatprep.subr.mxu0 0.0
    %747 = vmatpush2.xpose.msra.mxu0 %v556
    %748 = vmatprep.subr.mxu0 0.0
    %749 = vmatpush2.xpose.msra.mxu0 %v553
    %750 = vmatprep.subr.mxu0 0.0
    %751 = vmatpush2.xpose.msra.mxu0 %v550
    %752 = vmatprep.subr.mxu0 0.0
    %753 = vmatpush2.xpose.msra.mxu0 %v547
    %754 = vmatprep.mubr.f32.mxu0 0.0
    %755 = vmatmul.mubr.f32.gmra.mxu0 %v496
    %v756 = vpop.f32.mrf.mxu0
    %v757 = vadd.f32 0.0, %v756
    %v758 = vpop.f32.mrf.mxu0
    %v759 = vadd.f32 0.0, %v758
    %760 = vdwg.mxu0
    %761 = vmatprep.subr.mxu0 0.0
    %762 = vmatpush1.xpose.msra.mxu0 %v640
    %763 = vmatprep.subr.mxu0 0.0
    %764 = vmatpush1.xpose.msra.mxu0 %v637
    %765 = vmatprep.subr.mxu0 0.0
    %766 = vmatpush1.xpose.msra.mxu0 %v634
    %767 = vmatprep.subr.mxu0 0.0
    %768 = vmatpush1.xpose.msra.mxu0 %v631
    %769 = vmatprep.subr.mxu0 0.0
    %770 = vmatpush1.xpose.msra.mxu0 %v628
    %771 = vmatprep.subr.mxu0 0.0
    %772 = vmatpush1.xpose.msra.mxu0 %v625
    %773 = vmatprep.subr.mxu0 0.0
    %774 = vmatpush1.xpose.msra.mxu0 %v622
    %775 = vmatprep.subr.mxu0 0.0
    %776 = vmatpush1.xpose.msra.mxu0 %v619
    %777 = vmatprep.subr.mxu0 0.0
    %778 = vmatpush1.xpose.msra.mxu0 %v616
    %779 = vmatprep.subr.mxu0 0.0
    %780 = vmatpush1.xpose.msra.mxu0 %v613
    %781 = vmatprep.subr.mxu0 0.0
    %782 = vmatpush1.xpose.msra.mxu0 %v610
    %783 = vmatprep.subr.mxu0 0.0
    %784 = vmatpush1.xpose.msra.mxu0 %v607
    %785 = vmatprep.subr.mxu0 0.0
    %786 = vmatpush1.xpose.msra.mxu0 %v604
    %787 = vmatprep.subr.mxu0 0.0
    %788 = vmatpush1.xpose.msra.mxu0 %v601
    %789 = vmatprep.subr.mxu0 0.0
    %790 = vmatpush1.xpose.msra.mxu0 %v598
    %791 = vmatprep.subr.mxu0 0.0
    %792 = vmatpush1.xpose.msra.mxu0 %v595
    %793 = vmatprep.subr.mxu0 0.0
    %794 = vmatpush2.xpose.msra.mxu0 %v688
    %795 = vmatprep.subr.mxu0 0.0
    %796 = vmatpush2.xpose.msra.mxu0 %v685
    %797 = vmatprep.subr.mxu0 0.0
    %798 = vmatpush2.xpose.msra.mxu0 %v682
    %799 = vmatprep.subr.mxu0 0.0
    %800 = vmatpush2.xpose.msra.mxu0 %v679
    %801 = vmatprep.subr.mxu0 0.0
    %802 = vmatpush2.xpose.msra.mxu0 %v676
    %803 = vmatprep.subr.mxu0 0.0
    %804 = vmatpush2.xpose.msra.mxu0 %v673
    %805 = vmatprep.subr.mxu0 0.0
    %806 = vmatpush2.xpose.msra.mxu0 %v670
    %807 = vmatprep.subr.mxu0 0.0
    %808 = vmatpush2.xpose.msra.mxu0 %v667
    %809 = vmatprep.subr.mxu0 0.0
    %810 = vmatpush2.xpose.msra.mxu0 %v664
    %811 = vmatprep.subr.mxu0 0.0
    %812 = vmatpush2.xpose.msra.mxu0 %v661
    %813 = vmatprep.subr.mxu0 0.0
    %814 = vmatpush2.xpose.msra.mxu0 %v658
    %815 = vmatprep.subr.mxu0 0.0
    %816 = vmatpush2.xpose.msra.mxu0 %v655
    %817 = vmatprep.subr.mxu0 0.0
    %818 = vmatpush2.xpose.msra.mxu0 %v652
    %819 = vmatprep.subr.mxu0 0.0
    %820 = vmatpush2.xpose.msra.mxu0 %v649
    %821 = vmatprep.subr.mxu0 0.0
    %822 = vmatpush2.xpose.msra.mxu0 %v646
    %823 = vmatprep.subr.mxu0 0.0
    %824 = vmatpush2.xpose.msra.mxu0 %v643
    %825 = vmatprep.mubr.f32.mxu0 0.0
    %826 = vmatmul.mubr.f32.gmra.mxu0 %v496
    %v827 = vpop.f32.mrf.mxu0
    %v828 = vadd.f32 0.0, %v827
    %v829 = vpop.f32.mrf.mxu0
    %v830 = vadd.f32 0.0, %v829
    %831 = vdwg.mxu0
    %v832 = vmul.f32 %v757, 2.0
    %v833 = vlaneseq
    %v834 = vshrl.u32 %v833, 7
    %v835 = vsub.s32 0, %v834
    %v836 = vrot.slane %v155, %v835
    %v837 = vsub.f32 %v836, %v832
    %v838 = vlaneseq
    %v839 = vshrl.u32 %v838, 7
    %v840 = vsub.s32 0, %v839
    %v841 = vrot.slane %v154, %v840
    %v842 = vadd.f32 %v419, %v841
    %v843 = vmul.f32 %v759, 2.0
    %v844 = vlaneseq
    %v845 = vshrl.u32 %v844, 7
    %v846 = vsub.s32 1, %v845
    %v847 = vrot.slane %v155, %v846
    %v848 = vsub.f32 %v847, %v843
    %v849 = vlaneseq
    %v850 = vshrl.u32 %v849, 7
    %v851 = vsub.s32 1, %v850
    %v852 = vrot.slane %v154, %v851
    %v853 = vadd.f32 %v421, %v852
    %vm854 = vcmp.lt.f32.partialorder %v848, %v837
    %v855 = vsel %vm854, %v848, %v837
    %v856 = vsel %vm854, %v853, %v842
    %v857 = vmul.f32 %v828, 2.0
    %v858 = vlaneseq
    %v859 = vshrl.u32 %v858, 7
    %v860 = vsub.s32 2, %v859
    %v861 = vrot.slane %v155, %v860
    %v862 = vsub.f32 %v861, %v857
    %v863 = vlaneseq
    %v864 = vshrl.u32 %v863, 7
    %v865 = vsub.s32 2, %v864
    %v866 = vrot.slane %v154, %v865
    %v867 = vadd.f32 %v490, %v866
    %vm868 = vcmp.lt.f32.partialorder %v862, %v855
    %v869 = vsel %vm868, %v862, %v855
    %v870 = vsel %vm868, %v867, %v856
    %v871 = vmul.f32 %v830, 2.0
    %v872 = vlaneseq
    %v873 = vshrl.u32 %v872, 7
    %v874 = vsub.s32 3, %v873
    %v875 = vrot.slane %v155, %v874
    %v876 = vsub.f32 %v875, %v871
    %v877 = vlaneseq
    %v878 = vshrl.u32 %v877, 7
    %v879 = vsub.s32 3, %v878
    %v880 = vrot.slane %v154, %v879
    %v881 = vadd.f32 %v492, %v880
    %vm882 = vcmp.lt.f32.partialorder %v876, %v869
    %v883 = vsel %vm882, %v881, %v870
    %884 = vst [vmem:[#allocation2] sm:$0xff] %v883
    // Predicated region
    $region26: #{tpu_custom_call.1} parent=1 // pred_check
      _
    $region27: #{tpu_custom_call.1} parent=1 // pred_check_branch
      %886 = sbr.rel (0) target = $region29
    $region28: #{tpu_custom_call.1} parent=1 // pred_region
      %s888 = ssub.s32 128, 128
      %889 = vsyncadd [#allocation3], %s888
      %s891 = sshll.u32 [#allocation2], 4
      %s892 = int_to_ptr.vmem [resolvable:$true] %s891
      %894 = dma.vmem_to_hbm [thread:$0]  %s892, 128, %s6, [#allocation3]
    $region29: #{tpu_custom_call.1} parent=1 // pred_fallthru
      _
    // Predicated region
    $region30: #{tpu_custom_call.1} parent=1 // pred_check
      _
    $region31: #{tpu_custom_call.1} parent=1 // pred_check_branch
      %896 = sbr.rel (0) target = $region33
    $region32: #{tpu_custom_call.1} parent=1 // pred_region
      %897 = dma.done [#allocation3], 128
    $region33: #{tpu_custom_call.1} parent=1 // pred_fallthru
      _
    %898 = vsyncpa [#allocation3], 1

</llo_original>
